<compile_context>
chip_gen: v5e
topology: v5e:2x2
jax: 0.10.0
libtpu: 0.0.40
codegen_flags: <defaults>
</compile_context>

<pallas_src>
import functools

import jax
import jax.numpy as jnp
from jax.experimental import pallas as pl
from jax.experimental.pallas import tpu as pltpu

OUT_PAD = 128   # lane-dense output slab width (>= 4 + 3 + 1)
LANE = 128      # hidden-dim padding unit (lane width)


def _round_up(x, m):
    return -(-x // m) * m


# ----------------------------- Pallas kernel ---------------------------------
def _fused_pose_kernel(obj_ref,                    # scalar prefetch (SMEM), used by index_maps
                       x_ref,                      # (tile_m, F)
                       w1_ref, b1_ref,             # (F, 3*H1p), (1, 3*H1p)
                       w2_ref, b2_ref,             # (3, H1p, H2p), (3, 1, H2p)
                       w3_ref, b3_ref,             # per-object: (1, 3*H2p, 128), (1, 1, 128)
                       o_ref,                      # (1, tile_m, 128)
                       h2_ref,                     # VMEM scratch (tile_m, 3*H2p)
                       *, h1p, h2p, compute_dtype):
    del obj_ref  # consumed only by the index_maps (scalar prefetch)
    s = pl.program_id(1)

    # Object-independent trunks: run once per m-tile (s == 0), persist h2 in VMEM.
    @pl.when(s == 0)
    def _():
        x = x_ref[...]
        # Fused layer 1 for all three branches: one wide MXU pass over x.
        h1 = jnp.dot(x, w1_ref[...], preferred_element_type=jnp.float32) + b1_ref[...]
        h1 = jnp.maximum(h1, 0.0).astype(compute_dtype)
        # Layer 2 per branch (block-diagonal structure -> 3 small dots); results go
        # into lane-aligned slices of the persistent h2 scratch.
        for i in range(3):
            h1_i = h1[:, i * h1p:(i + 1) * h1p]
            h2_i = (jnp.dot(h1_i, w2_ref[i], preferred_element_type=jnp.float32)
                    + b2_ref[i])
            h2_ref[:, i * h2p:(i + 1) * h2p] = jnp.maximum(h2_i, 0.0).astype(compute_dtype)

    # Tiny per-object head: one fused dot against the stacked [w3r; w3t; w3c] slab
    # of the selected object. Columns 0:4 rot, 4:7 trans, 7:8 conf, rest zero pad.
    y = (jnp.dot(h2_ref[...], w3_ref[0], preferred_element_type=jnp.float32)
         + b3_ref[0])
    o_ref[0] = y.astype(o_ref.dtype)


# ----------------------------- Parameter packing (done once) ------------------
def prepare_pose_params(params_r, params_t, params_c, num_obj,
                        compute_dtype=jnp.bfloat16):
    """Pack / cast / zero-pad weights once at parameter-load time."""
    w1r, b1r, w2r, b2r, w3r, b3r = params_r
    w1t, b1t, w2t, b2t, w3t, b3t = params_t
    w1c, b1c, w2c, b2c, w3c, b3c = params_c
    feat_dim, h1 = w1r.shape
    h2 = w2r.shape[1]
    h1p = _round_up(h1, LANE)
    h2p = _round_up(h2, LANE)

    def pad2(a, rows, cols):
        return jnp.pad(a, ((0, rows - a.shape[0]), (0, cols - a.shape[1])))

    # Fused layer 1: (F, 3*H1p); each branch block zero-padded to H1p columns so
    # the in-kernel slices are lane-aligned (padded columns contribute exact 0).
    w1 = jnp.concatenate([pad2(w1r, feat_dim, h1p), pad2(w1t, feat_dim, h1p),
                          pad2(w1c, feat_dim, h1p)], axis=1).astype(compute_dtype)
    b1 = jnp.concatenate([pad2(b1r, 1, h1p), pad2(b1t, 1, h1p),
                          pad2(b1c, 1, h1p)], axis=1).astype(jnp.float32)
    # Layer 2: stacked (3, H1p, H2p) / (3, 1, H2p), zero-padded.
    w2 = jnp.stack([pad2(w2r, h1p, h2p), pad2(w2t, h1p, h2p),
                    pad2(w2c, h1p, h2p)]).astype(compute_dtype)
    b2 = jnp.stack([pad2(b2r, 1, h2p), pad2(b2t, 1, h2p),
                    pad2(b2c, 1, h2p)]).astype(jnp.float32)

    # Per-object fused head: (num_obj, 3*H2p, OUT_PAD) with object o's columns at
    # [0:4]=rot, [4:7]=trans, [7:8]=conf; rows [i*H2p : i*H2p+H2] hold branch i.
    def head(w3, k, row0, col0):
        cols = jnp.transpose(w3.reshape(h2, num_obj, k), (1, 0, 2))  # (num_obj, H2, k)
        slab = jnp.zeros((num_obj, 3 * h2p, OUT_PAD), jnp.float32)
        return slab.at[:, row0:row0 + h2, col0:col0 + k].set(cols)

    w3 = (head(w3r, 4, 0, 0) + head(w3t, 3, h2p, 4)
          + head(w3c, 1, 2 * h2p, 7)).astype(compute_dtype)
    b3 = jnp.zeros((num_obj, 1, OUT_PAD), jnp.float32)
    b3 = b3.at[:, 0, 0:4].set(b3r.reshape(num_obj, 4))
    b3 = b3.at[:, 0, 4:7].set(b3t.reshape(num_obj, 3))
    b3 = b3.at[:, 0, 7:8].set(b3c.reshape(num_obj, 1))

    return dict(w1=w1, b1=b1, w2=w2, b2=b2, w3=w3, b3=b3,
                feat_dim=feat_dim, h1p=h1p, h2p=h2p, num_obj=num_obj,
                compute_dtype=compute_dtype)


# ----------------------------- Wrapper ----------------------------------------
def _resident_spec(block_shape, index_map):
    """Single-buffered BlockSpec for VMEM-resident operands (constant / s-only
    block index): halves their VMEM footprint vs. default double buffering."""
    buffered = getattr(pl, "Buffered", None)
    if buffered is not None:
        try:
            return pl.BlockSpec(block_shape, index_map, pipeline_mode=buffered(1))
        except TypeError:   # older JAX without BlockSpec.pipeline_mode
            pass
    return pl.BlockSpec(block_shape, index_map)


def pose_predictor_forward(ap_x, obj, packed, num_points):
    """ap_x: (bs, feat_dim, num_points) NCL; obj: (bs, n_sel) int indices.
       Returns (out_rx, out_tx, out_cx) matching the PyTorch module (b = 0)."""
    cdt = packed["compute_dtype"]
    feat_dim, h1p, h2p = packed["feat_dim"], packed["h1p"], packed["h2p"]
    assert ap_x.shape[1] == feat_dim and ap_x.shape[2] == num_points

    # Only batch element 0 is consumed downstream -> skip the rest entirely.
    x = jnp.transpose(ap_x[0], (1, 0)).astype(cdt)        # (P, F) channels-last
    P = num_points
    n_sel = obj.shape[1]
    obj_sel = obj[0].astype(jnp.int32)

    # Fold points into a padded, vreg-aligned M dimension; keep >= 2 m-tiles at
    # DenseFusion-scale P so v7x megacore and x-tile prefetch both have work.
    m_align = 16                                          # bf16 sublane pack
    p_pad = _round_up(P, m_align)
    tile_m = min(256, max(m_align, _round_up(-(-p_pad // 2), m_align)))
    p_pad = _round_up(p_pad, tile_m)
    grid_m = p_pad // tile_m
    x = jnp.pad(x, ((0, p_pad - P), (0, 0)))

    w1, b1, w2, b2, w3, b3 = (packed[k] for k in ("w1", "b1", "w2", "b2", "w3", "b3"))

    kernel = functools.partial(_fused_pose_kernel, h1p=h1p, h2p=h2p,
                               compute_dtype=cdt)

    # Explicit VMEM budget from the actual block shapes (v5e scoped default is
    # only 16 MiB): single-buffered weights + double-buffered x/out + scratch +
    # f32 temporaries, with 2x headroom.
    cs = jnp.dtype(cdt).itemsize
    est = (2 * tile_m * feat_dim * cs               # x (double-buffered)
           + 2 * tile_m * OUT_PAD * cs              # out (double-buffered)
           + w1.size * cs + b1.size * 4             # fused layer-1 (single-buffered)
           + w2.size * cs + b2.size * 4             # layer-2 stack (single-buffered)
           + 3 * h2p * OUT_PAD * cs + OUT_PAD * 4   # per-object head block
           + tile_m * 3 * h2p * cs                  # persistent h2 scratch
           + tile_m * 3 * h1p * 4                   # h1 f32 temporary
           + tile_m * h2p * 4                       # h2_i f32 temporary
           + tile_m * OUT_PAD * 4)                  # y f32 temporary
    vmem_limit = int(min(max(2 * est, 32 * 1024 * 1024), 100 * 1024 * 1024))

    # index_maps receive (m, s, objp) with objp the scalar-prefetched SMEM ref.
    grid_spec = pltpu.PrefetchScalarGridSpec(
        num_scalar_prefetch=1,
        grid=(grid_m, n_sel),
        in_specs=[
            pl.BlockSpec((tile_m, feat_dim), lambda m, s, objp: (m, 0)),
            _resident_spec(w1.shape, lambda m, s, objp: (0, 0)),
            _resident_spec(b1.shape, lambda m, s, objp: (0, 0)),
            _resident_spec(w2.shape, lambda m, s, objp: (0, 0, 0)),
            _resident_spec(b2.shape, lambda m, s, objp: (0, 0, 0)),
            _resident_spec((1,) + w3.shape[1:], lambda m, s, objp: (objp[s], 0, 0)),
            _resident_spec((1,) + b3.shape[1:], lambda m, s, objp: (objp[s], 0, 0)),
        ],
        out_specs=pl.BlockSpec((1, tile_m, OUT_PAD), lambda m, s, objp: (s, m, 0)),
        scratch_shapes=[pltpu.VMEM((tile_m, 3 * h2p), cdt)],
    )

    y = pl.pallas_call(
        kernel,
        out_shape=jax.ShapeDtypeStruct((n_sel, p_pad, OUT_PAD), cdt),
        grid_spec=grid_spec,
        compiler_params=pltpu.CompilerParams(
            dimension_semantics=("parallel", "arbitrary"),
            vmem_limit_bytes=vmem_limit),
    )(obj_sel, x, w1, b1, w2, b2, w3, b3)

    # NOTE: rows P..p_pad of the raw kernel output contain padding garbage and
    # must never be read — they are sliced away here.
    y = y[:, :num_points, :].astype(jnp.float32)
    out_rx = y[..., 0:4]                          # (n_sel, P, 4)
    out_tx = y[..., 4:7]                          # (n_sel, P, 3)
    out_cx = jax.nn.sigmoid(y[..., 7:8])          # (n_sel, P, 1), sigmoid in wrapper
    return out_rx, out_tx, out_cx


# ----------------------------- Parameter setup --------------------------------
def make_mlp_params(key, feat_dim, h1, h2, out_dim):
    ks = jax.random.split(key, 6)
    scale = 0.1
    # Weights stored as (in, out) so the kernel can do X @ W directly.
    w1 = scale * jax.random.normal(ks[0], (feat_dim, h1), jnp.float32)
    b1 = scale * jax.random.normal(ks[1], (1, h1), jnp.float32)
    w2 = scale * jax.random.normal(ks[2], (h1, h2), jnp.float32)
    b2 = scale * jax.random.normal(ks[3], (1, h2), jnp.float32)
    w3 = scale * jax.random.normal(ks[4], (h2, out_dim), jnp.float32)
    b3 = scale * jax.random.normal(ks[5], (1, out_dim), jnp.float32)
    return (w1, b1, w2, b2, w3, b3)


# ----------------------------- Pure-JAX reference ------------------------------
def _mlp_ref(x, params, apply_sigmoid=False):
    w1, b1, w2, b2, w3, b3 = params
    h1 = jnp.maximum(x @ w1 + b1, 0.0)
    h2 = jnp.maximum(h1 @ w2 + b2, 0.0)
    y = h2 @ w3 + b3
    return jax.nn.sigmoid(y) if apply_sigmoid else y


def pose_predictor_ref(ap_x, obj, params_r, params_t, params_c, num_obj, num_points):
    bs = ap_x.shape[0]
    x = jnp.transpose(ap_x, (0, 2, 1))
    rx = jnp.transpose(_mlp_ref(x, params_r), (0, 2, 1)).reshape(bs, num_obj, 4, num_points)
    tx = jnp.transpose(_mlp_ref(x, params_t), (0, 2, 1)).reshape(bs, num_obj, 3, num_points)
    cx = jnp.transpose(_mlp_ref(x, params_c, True), (0, 2, 1)).reshape(bs, num_obj, 1, num_points)
    b = 0
    return (jnp.transpose(jnp.take(rx[b], obj[b], axis=0), (0, 2, 1)),
            jnp.transpose(jnp.take(tx[b], obj[b], axis=0), (0, 2, 1)),
            jnp.transpose(jnp.take(cx[b], obj[b], axis=0), (0, 2, 1)))


# ----------------------------- Main --------------------------------------------
if __name__ == "__main__":
    bs, feat_dim, num_points, num_obj = 2, 32, 8, 4
    h1, h2 = 64, 32

    key = jax.random.PRNGKey(0)
    k_x, k_r, k_t, k_c = jax.random.split(key, 4)

    ap_x = jax.random.normal(k_x, (bs, feat_dim, num_points), jnp.float32)
    obj1 = jnp.array([[1], [2]], dtype=jnp.int32)        # single selected object
    obj2 = jnp.array([[1, 3], [2, 0]], dtype=jnp.int32)  # exercises the n_sel axis

    params_r = make_mlp_params(k_r, feat_dim, h1, h2, num_obj * 4)
    params_t = make_mlp_params(k_t, feat_dim, h1, h2, num_obj * 3)
    params_c = make_mlp_params(k_c, feat_dim, h1, h2, num_obj * 1)

    # Weight packing / casting hoisted: done once, reused across forward calls.
    packed_f32 = prepare_pose_params(params_r, params_t, params_c, num_obj, jnp.float32)
    packed_bf16 = prepare_pose_params(params_r, params_t, params_c, num_obj, jnp.bfloat16)

    for obj in (obj1, obj2):
        n_sel = obj.shape[1]
        ref_rx, ref_tx, ref_cx = pose_predictor_ref(
            ap_x, obj, params_r, params_t, params_c, num_obj, num_points)

        # f32 operands: tight match against the pure-JAX reference.
        out_f32 = pose_predictor_forward(ap_x, obj, packed_f32, num_points)
        jax.block_until_ready(out_f32)
        # bf16 operands (f32 MXU accumulation): the perf-default path on v6e/v7x.
        out_bf16 = pose_predictor_forward(ap_x, obj, packed_bf16, num_points)
        jax.block_until_ready(out_bf16)

        assert out_f32[0].shape == (n_sel, num_points, 4)
        assert out_f32[1].shape == (n_sel, num_points, 3)
        assert out_f32[2].shape == (n_sel, num_points, 1)

        for got, want in zip(out_f32, (ref_rx, ref_tx, ref_cx)):
            assert jnp.allclose(got, want, atol=1e-4, rtol=1e-4)
        for got, want in zip(out_bf16, (ref_rx, ref_tx, ref_cx)):
            assert jnp.allclose(got, want, atol=5e-2, rtol=5e-2)

    print("KERNEL_OK")
</pallas_src>

<mosaic_0001>
module attributes {stable_mosaic.version = 11 : i64} {
  func.func @_fused_pose_kernel(%arg0: i32, %arg1: i32, %arg2: memref<1xi32, #tpu.memory_space<smem>>, %arg3: memref<16x32xf32, #tpu.memory_space<vmem>>, %arg4: memref<32x384xf32, #tpu.memory_space<vmem>>, %arg5: memref<1x384xf32, #tpu.memory_space<vmem>>, %arg6: memref<3x128x128xf32, #tpu.memory_space<vmem>>, %arg7: memref<3x1x128xf32, #tpu.memory_space<vmem>>, %arg8: memref<1x384x128xf32, #tpu.memory_space<vmem>>, %arg9: memref<1x1x128xf32, #tpu.memory_space<vmem>>, %arg10: memref<1x16x128xf32, #tpu.memory_space<vmem>>, %arg11: memref<16x384xf32, #tpu.memory_space<vmem>>) attributes {dimension_semantics = [#tpu.dimension_semantics<parallel>, #tpu.dimension_semantics<arbitrary>], iteration_bounds = array<i64: 1, 1>, scalar_prefetch = 1 : i64, scratch_operands = 1 : i64, tpu.core_type = #tpu.core_type<tc>, window_params = [{transform_indices = @transform_0, window_bounds = array<i64: 16, 32>}, {pipeline_mode = #tpu.pipeline_mode<synchronous>, transform_indices = @transform_1, window_bounds = array<i64: 32, 384>}, {pipeline_mode = #tpu.pipeline_mode<synchronous>, transform_indices = @transform_2, window_bounds = array<i64: 1, 384>}, {pipeline_mode = #tpu.pipeline_mode<synchronous>, transform_indices = @transform_3, window_bounds = array<i64: 3, 128, 128>}, {pipeline_mode = #tpu.pipeline_mode<synchronous>, transform_indices = @transform_4, window_bounds = array<i64: 3, 1, 128>}, {pipeline_mode = #tpu.pipeline_mode<synchronous>, transform_indices = @transform_5, window_bounds = array<i64: 1, 384, 128>}, {pipeline_mode = #tpu.pipeline_mode<synchronous>, transform_indices = @transform_6, window_bounds = array<i64: 1, 1, 128>}, {transform_indices = @transform_7, window_bounds = array<i64: 1, 16, 128>}]} {
    %c0_i32 = arith.constant 0 : i32
    %0 = arith.cmpi eq, %arg1, %c0_i32 : i32
    %1 = arith.extui %0 : i1 to i32
    %c0_i32_0 = arith.constant 0 : i32
    %2 = arith.cmpi ne, %1, %c0_i32_0 : i32
    scf.if %2 {
      %c0_11 = arith.constant 0 : index
      %c0_12 = arith.constant 0 : index
      %14 = vector.load %arg3[%c0_11, %c0_12] : memref<16x32xf32, #tpu.memory_space<vmem>>, vector<16x32xf32>
      %c0_13 = arith.constant 0 : index
      %c0_14 = arith.constant 0 : index
      %15 = vector.load %arg4[%c0_13, %c0_14] : memref<32x384xf32, #tpu.memory_space<vmem>>, vector<32x384xf32>
      %cst_15 = arith.constant dense<0.000000e+00> : vector<16x384xf32>
      %16 = tpu.matmul %14, %15, %cst_15 {dimension_numbers = #tpu.dot_dimension_numbers<[1], [0], [0], [1], [0, 0, 1, 1], [], []>} : vector<16x32xf32>, vector<32x384xf32>, vector<16x384xf32> -> vector<16x384xf32>
      %c0_16 = arith.constant 0 : index
      %c0_17 = arith.constant 0 : index
      %17 = vector.load %arg5[%c0_16, %c0_17] : memref<1x384xf32, #tpu.memory_space<vmem>>, vector<1x384xf32>
      %18 = vector.broadcast %17 : vector<1x384xf32> to vector<16x384xf32>
      %19 = arith.addf %16, %18 : vector<16x384xf32>
      %cst_18 = arith.constant 0.000000e+00 : f32
      %20 = vector.broadcast %cst_18 : f32 to vector<16x384xf32>
      %21 = arith.maximumf %19, %20 : vector<16x384xf32>
      %22 = vector.extract_strided_slice %21 {offsets = [0, 0], sizes = [16, 128], strides = [1, 1]} : vector<16x384xf32> to vector<16x128xf32>
      %c0_19 = arith.constant 0 : index
      %c0_20 = arith.constant 0 : index
      %c0_21 = arith.constant 0 : index
      %23 = vector.load %arg6[%c0_19, %c0_20, %c0_21] : memref<3x128x128xf32, #tpu.memory_space<vmem>>, vector<1x128x128xf32>
      %24 = vector.shape_cast %23 : vector<1x128x128xf32> to vector<128x128xf32>
      %cst_22 = arith.constant dense<0.000000e+00> : vector<16x128xf32>
      %25 = tpu.matmul %22, %24, %cst_22 {dimension_numbers = #tpu.dot_dimension_numbers<[1], [0], [0], [1], [0, 0, 1, 1], [], []>} : vector<16x128xf32>, vector<128x128xf32>, vector<16x128xf32> -> vector<16x128xf32>
      %c0_23 = arith.constant 0 : index
      %c0_24 = arith.constant 0 : index
      %c0_25 = arith.constant 0 : index
      %26 = vector.load %arg7[%c0_23, %c0_24, %c0_25] : memref<3x1x128xf32, #tpu.memory_space<vmem>>, vector<1x1x128xf32>
      %27 = vector.shape_cast %26 : vector<1x1x128xf32> to vector<1x128xf32>
      %28 = vector.broadcast %27 : vector<1x128xf32> to vector<16x128xf32>
      %29 = arith.addf %25, %28 : vector<16x128xf32>
      %cst_26 = arith.constant 0.000000e+00 : f32
      %30 = vector.broadcast %cst_26 : f32 to vector<16x128xf32>
      %31 = arith.maximumf %29, %30 : vector<16x128xf32>
      %c0_27 = arith.constant 0 : index
      %c0_28 = arith.constant 0 : index
      %32 = vector.load %arg11[%c0_27, %c0_28] : memref<16x384xf32, #tpu.memory_space<vmem>>, vector<16x128xf32>
      tpu.vector_store %arg11[%c0_27, %c0_28], %31 {strides = array<i32>} : memref<16x384xf32, #tpu.memory_space<vmem>>, vector<16x128xf32>,
      %33 = vector.extract_strided_slice %21 {offsets = [0, 128], sizes = [16, 128], strides = [1, 1]} : vector<16x384xf32> to vector<16x128xf32>
      %c1 = arith.constant 1 : index
      %c0_29 = arith.constant 0 : index
      %c0_30 = arith.constant 0 : index
      %34 = vector.load %arg6[%c1, %c0_29, %c0_30] : memref<3x128x128xf32, #tpu.memory_space<vmem>>, vector<1x128x128xf32>
      %35 = vector.shape_cast %34 : vector<1x128x128xf32> to vector<128x128xf32>
      %cst_31 = arith.constant dense<0.000000e+00> : vector<16x128xf32>
      %36 = tpu.matmul %33, %35, %cst_31 {dimension_numbers = #tpu.dot_dimension_numbers<[1], [0], [0], [1], [0, 0, 1, 1], [], []>} : vector<16x128xf32>, vector<128x128xf32>, vector<16x128xf32> -> vector<16x128xf32>
      %c1_32 = arith.constant 1 : index
      %c0_33 = arith.constant 0 : index
      %c0_34 = arith.constant 0 : index
      %37 = vector.load %arg7[%c1_32, %c0_33, %c0_34] : memref<3x1x128xf32, #tpu.memory_space<vmem>>, vector<1x1x128xf32>
      %38 = vector.shape_cast %37 : vector<1x1x128xf32> to vector<1x128xf32>
      %39 = vector.broadcast %38 : vector<1x128xf32> to vector<16x128xf32>
      %40 = arith.addf %36, %39 : vector<16x128xf32>
      %cst_35 = arith.constant 0.000000e+00 : f32
      %41 = vector.broadcast %cst_35 : f32 to vector<16x128xf32>
      %42 = arith.maximumf %40, %41 : vector<16x128xf32>
      %c0_36 = arith.constant 0 : index
      %c128 = arith.constant 128 : index
      %43 = vector.load %arg11[%c0_36, %c128] : memref<16x384xf32, #tpu.memory_space<vmem>>, vector<16x128xf32>
      tpu.vector_store %arg11[%c0_36, %c128], %42 {strides = array<i32>} : memref<16x384xf32, #tpu.memory_space<vmem>>, vector<16x128xf32>,
      %44 = vector.extract_strided_slice %21 {offsets = [0, 256], sizes = [16, 128], strides = [1, 1]} : vector<16x384xf32> to vector<16x128xf32>
      %c2 = arith.constant 2 : index
      %c0_37 = arith.constant 0 : index
      %c0_38 = arith.constant 0 : index
      %45 = vector.load %arg6[%c2, %c0_37, %c0_38] : memref<3x128x128xf32, #tpu.memory_space<vmem>>, vector<1x128x128xf32>
      %46 = vector.shape_cast %45 : vector<1x128x128xf32> to vector<128x128xf32>
      %cst_39 = arith.constant dense<0.000000e+00> : vector<16x128xf32>
      %47 = tpu.matmul %44, %46, %cst_39 {dimension_numbers = #tpu.dot_dimension_numbers<[1], [0], [0], [1], [0, 0, 1, 1], [], []>} : vector<16x128xf32>, vector<128x128xf32>, vector<16x128xf32> -> vector<16x128xf32>
      %c2_40 = arith.constant 2 : index
      %c0_41 = arith.constant 0 : index
      %c0_42 = arith.constant 0 : index
      %48 = vector.load %arg7[%c2_40, %c0_41, %c0_42] : memref<3x1x128xf32, #tpu.memory_space<vmem>>, vector<1x1x128xf32>
      %49 = vector.shape_cast %48 : vector<1x1x128xf32> to vector<1x128xf32>
      %50 = vector.broadcast %49 : vector<1x128xf32> to vector<16x128xf32>
      %51 = arith.addf %47, %50 : vector<16x128xf32>
      %cst_43 = arith.constant 0.000000e+00 : f32
      %52 = vector.broadcast %cst_43 : f32 to vector<16x128xf32>
      %53 = arith.maximumf %51, %52 : vector<16x128xf32>
      %c0_44 = arith.constant 0 : index
      %c256 = arith.constant 256 : index
      %54 = vector.load %arg11[%c0_44, %c256] : memref<16x384xf32, #tpu.memory_space<vmem>>, vector<16x128xf32>
      tpu.vector_store %arg11[%c0_44, %c256], %53 {strides = array<i32>} : memref<16x384xf32, #tpu.memory_space<vmem>>, vector<16x128xf32>,
    } else {
    }
    %c0 = arith.constant 0 : index
    %c0_1 = arith.constant 0 : index
    %3 = vector.load %arg11[%c0, %c0_1] : memref<16x384xf32, #tpu.memory_space<vmem>>, vector<16x384xf32>
    %c0_2 = arith.constant 0 : index
    %c0_3 = arith.constant 0 : index
    %c0_4 = arith.constant 0 : index
    %4 = vector.load %arg8[%c0_2, %c0_3, %c0_4] : memref<1x384x128xf32, #tpu.memory_space<vmem>>, vector<1x384x128xf32>
    %5 = vector.shape_cast %4 : vector<1x384x128xf32> to vector<384x128xf32>
    %cst = arith.constant dense<0.000000e+00> : vector<16x128xf32>
    %6 = tpu.matmul %3, %5, %cst {dimension_numbers = #tpu.dot_dimension_numbers<[1], [0], [0], [1], [0, 0, 1, 1], [], []>} : vector<16x384xf32>, vector<384x128xf32>, vector<16x128xf32> -> vector<16x128xf32>
    %c0_5 = arith.constant 0 : index
    %c0_6 = arith.constant 0 : index
    %c0_7 = arith.constant 0 : index
    %7 = vector.load %arg9[%c0_5, %c0_6, %c0_7] : memref<1x1x128xf32, #tpu.memory_space<vmem>>, vector<1x1x128xf32>
    %8 = vector.shape_cast %7 : vector<1x1x128xf32> to vector<1x128xf32>
    %9 = vector.broadcast %8 : vector<1x128xf32> to vector<16x128xf32>
    %10 = arith.addf %6, %9 : vector<16x128xf32>
    %c0_8 = arith.constant 0 : index
    %c0_9 = arith.constant 0 : index
    %c0_10 = arith.constant 0 : index
    %11 = vector.load %arg10[%c0_8, %c0_9, %c0_10] : memref<1x16x128xf32, #tpu.memory_space<vmem>>, vector<1x16x128xf32>
    %12 = vector.shape_cast %11 : vector<1x16x128xf32> to vector<16x128xf32>
    %13 = vector.shape_cast %10 : vector<16x128xf32> to vector<1x16x128xf32>
    tpu.vector_store %arg10[%c0_8, %c0_9, %c0_10], %13 {strides = array<i32>} : memref<1x16x128xf32, #tpu.memory_space<vmem>>, vector<1x16x128xf32>,
    return
  }
  func.func @transform_0(%arg0: i32, %arg1: i32, %arg2: memref<1xi32, #tpu.memory_space<smem>>) -> (i32, i32) {
    %c0_i32 = arith.constant 0 : i32
    %c0_i32_0 = arith.constant 0 : i32
    return %arg0, %c0_i32 : i32, i32
  }
  func.func @transform_1(%arg0: i32, %arg1: i32, %arg2: memref<1xi32, #tpu.memory_space<smem>>) -> (i32, i32) {
    %c0_i32 = arith.constant 0 : i32
    %c0_i32_0 = arith.constant 0 : i32
    %c0_i32_1 = arith.constant 0 : i32
    return %c0_i32, %c0_i32_0 : i32, i32
  }
  func.func @transform_2(%arg0: i32, %arg1: i32, %arg2: memref<1xi32, #tpu.memory_space<smem>>) -> (i32, i32) {
    %c0_i32 = arith.constant 0 : i32
    %c0_i32_0 = arith.constant 0 : i32
    %c0_i32_1 = arith.constant 0 : i32
    return %c0_i32, %c0_i32_0 : i32, i32
  }
  func.func @transform_3(%arg0: i32, %arg1: i32, %arg2: memref<1xi32, #tpu.memory_space<smem>>) -> (i32, i32, i32) {
    %c0_i32 = arith.constant 0 : i32
    %c0_i32_0 = arith.constant 0 : i32
    %c0_i32_1 = arith.constant 0 : i32
    %c0_i32_2 = arith.constant 0 : i32
    return %c0_i32, %c0_i32_0, %c0_i32_1 : i32, i32, i32
  }
  func.func @transform_4(%arg0: i32, %arg1: i32, %arg2: memref<1xi32, #tpu.memory_space<smem>>) -> (i32, i32, i32) {
    %c0_i32 = arith.constant 0 : i32
    %c0_i32_0 = arith.constant 0 : i32
    %c0_i32_1 = arith.constant 0 : i32
    %c0_i32_2 = arith.constant 0 : i32
    return %c0_i32, %c0_i32_0, %c0_i32_1 : i32, i32, i32
  }
  func.func @transform_5(%arg0: i32, %arg1: i32, %arg2: memref<1xi32, #tpu.memory_space<smem>>) -> (i32, i32, i32) {
    %0 = arith.index_cast %arg1 : i32 to index
    %1 = memref.load %arg2[%0] : memref<1xi32, #tpu.memory_space<smem>>
    %c0_i32 = arith.constant 0 : i32
    %c0_i32_0 = arith.constant 0 : i32
    %c0_i32_1 = arith.constant 0 : i32
    return %1, %c0_i32, %c0_i32_0 : i32, i32, i32
  }
  func.func @transform_6(%arg0: i32, %arg1: i32, %arg2: memref<1xi32, #tpu.memory_space<smem>>) -> (i32, i32, i32) {
    %0 = arith.index_cast %arg1 : i32 to index
    %1 = memref.load %arg2[%0] : memref<1xi32, #tpu.memory_space<smem>>
    %c0_i32 = arith.constant 0 : i32
    %c0_i32_0 = arith.constant 0 : i32
    %c0_i32_1 = arith.constant 0 : i32
    return %1, %c0_i32, %c0_i32_0 : i32, i32, i32
  }
  func.func @transform_7(%arg0: i32, %arg1: i32, %arg2: memref<1xi32, #tpu.memory_space<smem>>) -> (i32, i32, i32) {
    %c0_i32 = arith.constant 0 : i32
    %c0_i32_0 = arith.constant 0 : i32
    return %arg1, %arg0, %c0_i32 : i32, i32, i32
  }
}

</mosaic_0001>

<llo_original>
// kernel: tpu_custom_call.1
$region0: #{tpu_custom_call.1}
  #allocation0 [shape = 'u32[]', space=smem, size = 0x4, offset = 0x4, fixed_abs, tag = 'smem constant byte address 0x4 - core index']
  #allocation1 [shape = 'u32[72,128]{1,0:T(1,128)}', space=vmem, size = 0x9000, scoped, tag = 'internal scratch']
  #allocation2 [shape = 'f32[16,384]{1,0:T(8,128)}', space=vmem, size = 0x6000, scoped, tag = 'scratch operand']
  #allocation3 [shape = 's32[1]{0}', space=sflag, size = 0x4, scoped, tag = 'scoped memory for tpu_custom_call.1']
  #allocation4 [shape = 's32[1]{0:T(128)S(6)}', space=smem, size = 0x200, scoped, tag = 'prefetched SMEM operand 0']
  %s0 = inlined_call_operand.<no memory space> [shape: s32[1], index: 0, kind: input, shape index: {}]
  %s1 = inlined_call_operand.hbm [shape: f32[16,32], index: 1, kind: input, shape index: {}]
  %s2 = inlined_call_operand.hbm [shape: f32[32,384], index: 2, kind: input, shape index: {}]
  %s3 = inlined_call_operand.vmem [shape: f32[1,384], index: 3, kind: input, shape index: {}]
  %s4 = inlined_call_operand.hbm [shape: f32[3,128,128], index: 4, kind: input, shape index: {}]
  %s5 = inlined_call_operand.hbm [shape: f32[3,1,128], index: 5, kind: input, shape index: {}]
  %s6 = inlined_call_operand.hbm [shape: f32[4,384,128], index: 6, kind: input, shape index: {}]
  %s7 = inlined_call_operand.vmem [shape: f32[4,1,128], index: 7, kind: input, shape index: {}]
  %s8 = inlined_call_operand.hbm [shape: f32[1,16,128], index: 8, kind: output, shape index: {}]
  %s9 = sld [smem:[#allocation0]]
  $region62: #{tpu_custom_call.1} parent=0
    _
  %s11 = ssub.s32 1, %s9
  %s12 = scalar_select 0, %s11, %s9
  %13 = sst [smem:[#allocation4]] %s0
  $region1: #{tpu_custom_call.1} parent=0
    #allocation5 [shape = 'u8[8192]{0}', space=vmem, size = 0x2000, scoped, tag = 'input window, operand 1, single buffered']
    #allocation6 [shape = 's32[1]{0}', space=sflag, size = 0x4, scoped, tag = 'scoped memory for tpu_custom_call.1']
    #allocation7 [shape = 's32[1]{0}', space=sflag, size = 0x4, scoped, tag = 'scoped memory for tpu_custom_call.1']
    #allocation8 [shape = 'u8[49152]{0}', space=vmem, size = 0xc000, scoped, tag = 'input window, operand 2, single buffered']
    #allocation9 [shape = 's32[1]{0}', space=sflag, size = 0x4, scoped, tag = 'scoped memory for tpu_custom_call.1']
    #allocation10 [shape = 'u8[196608]{0}', space=vmem, size = 0x30000, scoped, tag = 'input window, operand 4, single buffered']
    #allocation11 [shape = 'u8[1536]{0}', space=vmem, size = 0x800, scoped, tag = 'input window, operand 5, single buffered']
    #allocation12 [shape = 's32[1]{0}', space=sflag, size = 0x4, scoped, tag = 'scoped memory for tpu_custom_call.1']
    #allocation13 [shape = 'u8[196608]{0}', space=vmem, size = 0x30000, scoped, tag = 'input window, operand 6, single buffered']
    #allocation14 [shape = 'u8[8192]{0}', space=vmem, size = 0x2000, scoped, tag = 'output window, operand 0, single buffered']
    %14 = vsyncpa [#allocation6], 0
    %15 = vsyncpa [#allocation9], 0
    %16 = vsyncpa [#allocation12], 0
    %17 = vsyncpa [#allocation7], 0
    // Predicated region
    $region2: #{tpu_custom_call.1} parent=1 // pred_check
      _
    $region3: #{tpu_custom_call.1} parent=1 // pred_check_branch
      %19 = sbr.rel (0) target = $region5
    $region4: #{tpu_custom_call.1} parent=1 // pred_region
      %21 = vsyncadd [#allocation6], 0
      %s22 = sshll.u32 %s1, 4
      %s23 = int_to_ptr.hbm [resolvable:$true] %s22
      %s24 = sshll.u32 [#allocation5], 4
      %s25 = int_to_ptr.vmem [resolvable:$true] %s24
      %30 = dma.hbm_to_vmem [thread:$0]  %s23, 256, %s25, [#allocation6], 128, 128, 8
    $region5: #{tpu_custom_call.1} parent=1 // pred_fallthru
      _
    // Predicated region
    $region6: #{tpu_custom_call.1} parent=1 // pred_check
      _
    $region7: #{tpu_custom_call.1} parent=1 // pred_check_branch
      %32 = sbr.rel (0) target = $region9
    $region8: #{tpu_custom_call.1} parent=1 // pred_region
      %34 = vsyncadd [#allocation9], 0
      %s35 = sshll.u32 %s2, 4
      %s36 = int_to_ptr.hbm [resolvable:$true] %s35
      %s37 = sshll.u32 [#allocation8], 4
      %s38 = int_to_ptr.vmem [resolvable:$true] %s37
      %43 = dma.hbm_to_vmem [thread:$0]  %s36, 1536, %s38, [#allocation9], 384, 384, 24
    $region9: #{tpu_custom_call.1} parent=1 // pred_fallthru
      _
    // Predicated region
    $region10: #{tpu_custom_call.1} parent=1 // pred_check
      _
    $region11: #{tpu_custom_call.1} parent=1 // pred_check_branch
      %45 = sbr.rel (0) target = $region13
    $region12: #{tpu_custom_call.1} parent=1 // pred_region
      _
    $region13: #{tpu_custom_call.1} parent=1 // pred_fallthru
      _
    // Predicated region
    $region14: #{tpu_custom_call.1} parent=1 // pred_check
      _
    $region15: #{tpu_custom_call.1} parent=1 // pred_check_branch
      %47 = sbr.rel (0) target = $region17
    $region16: #{tpu_custom_call.1} parent=1 // pred_region
      %49 = vsyncadd [#allocation9], 0
      %s50 = sshll.u32 %s4, 4
      %s51 = int_to_ptr.hbm [resolvable:$true] %s50
      %s52 = sshll.u32 [#allocation10], 4
      %s53 = int_to_ptr.vmem [resolvable:$true] %s52
      %58 = dma.hbm_to_vmem [thread:$0]  %s51, 6144, %s53, [#allocation9], 128, 128, 8
    $region17: #{tpu_custom_call.1} parent=1 // pred_fallthru
      _
    // Predicated region
    $region18: #{tpu_custom_call.1} parent=1 // pred_check
      _
    $region19: #{tpu_custom_call.1} parent=1 // pred_check_branch
      %60 = sbr.rel (0) target = $region21
    $region20: #{tpu_custom_call.1} parent=1 // pred_region
      %62 = vsyncadd [#allocation12], 0
      %s63 = sshll.u32 %s5, 4
      %s64 = int_to_ptr.hbm [resolvable:$true] %s63
      %s65 = sshll.u32 [#allocation11], 4
      %s66 = int_to_ptr.vmem [resolvable:$true] %s65
      %71 = dma.hbm_to_vmem [thread:$0]  %s64, 48, %s66, [#allocation12], 16, 16, 1
    $region21: #{tpu_custom_call.1} parent=1 // pred_fallthru
      _
    // Predicated region
    $region22: #{tpu_custom_call.1} parent=1 // pred_check
      _
    $region23: #{tpu_custom_call.1} parent=1 // pred_check_branch
      %73 = sbr.rel (0) target = $region25
    $region24: #{tpu_custom_call.1} parent=1 // pred_region
      %s74 = sld [smem:[#allocation4]]
      %76 = vsyncadd [#allocation12], 0
      %s77 = smul.addr %s74, 48
      %s78 = smul.addr %s77, 8
      %s79 = scalar_lea.hbm %s6, %s78
      %s80 = sshll.u32 %s79, 4
      %s81 = int_to_ptr.hbm [resolvable:$true] %s80
      %s82 = sshll.u32 [#allocation13], 4
      %s83 = int_to_ptr.vmem [resolvable:$true] %s82
      %88 = dma.hbm_to_vmem [thread:$0]  %s81, 6144, %s83, [#allocation12], 128, 128, 8
    $region25: #{tpu_custom_call.1} parent=1 // pred_fallthru
      _
    // Predicated region
    $region26: #{tpu_custom_call.1} parent=1 // pred_check
      _
    $region27: #{tpu_custom_call.1} parent=1 // pred_check_branch
      %90 = sbr.rel (0) target = $region29
    $region28: #{tpu_custom_call.1} parent=1 // pred_region
      %s91 = sld [smem:[#allocation4]]
      %p92 = scmp.lt.s32.totalorder %s91, 3
      %s93 = scalar_select %p92, %s91, 3
      %s94 = scalar_lea.vmem %s7, %s93
      %s95 = sld [smem:[#allocation4]]
    $region29: #{tpu_custom_call.1} parent=1 // pred_fallthru
      _
    // Predicated region
    $region30: #{tpu_custom_call.1} parent=1 // pred_check
      _
    $region31: #{tpu_custom_call.1} parent=1 // pred_check_branch
      %97 = sbr.rel (0) target = $region33
    $region32: #{tpu_custom_call.1} parent=1 // pred_region
      %99 = dma.done [#allocation6], 256
    $region33: #{tpu_custom_call.1} parent=1 // pred_fallthru
      _
    // Predicated region
    $region34: #{tpu_custom_call.1} parent=1 // pred_check
      _
    $region35: #{tpu_custom_call.1} parent=1 // pred_check_branch
      %101 = sbr.rel (0) target = $region37
    $region36: #{tpu_custom_call.1} parent=1 // pred_region
      %103 = dma.done [#allocation9], 1536
    $region37: #{tpu_custom_call.1} parent=1 // pred_fallthru
      _
    // Predicated region
    $region38: #{tpu_custom_call.1} parent=1 // pred_check
      _
    $region39: #{tpu_custom_call.1} parent=1 // pred_check_branch
      %105 = sbr.rel (0) target = $region41
    $region40: #{tpu_custom_call.1} parent=1 // pred_region
      %107 = dma.done [#allocation9], 6144
    $region41: #{tpu_custom_call.1} parent=1 // pred_fallthru
      _
    // Predicated region
    $region42: #{tpu_custom_call.1} parent=1 // pred_check
      _
    $region43: #{tpu_custom_call.1} parent=1 // pred_check_branch
      %109 = sbr.rel (0) target = $region45
    $region44: #{tpu_custom_call.1} parent=1 // pred_region
      %111 = dma.done [#allocation12], 48
    $region45: #{tpu_custom_call.1} parent=1 // pred_fallthru
      _
    // Predicated region
    $region46: #{tpu_custom_call.1} parent=1 // pred_check
      _
    $region47: #{tpu_custom_call.1} parent=1 // pred_check_branch
      %113 = sbr.rel (0) target = $region49
    $region48: #{tpu_custom_call.1} parent=1 // pred_region
      %115 = dma.done [#allocation12], 6144
    $region49: #{tpu_custom_call.1} parent=1 // pred_fallthru
      _
    %s116 = sld [smem:[#allocation4]]
    %p117 = scmp.lt.s32.totalorder %s116, 3
    %s118 = scalar_select %p117, %s116, 3
    %s119 = scalar_lea.vmem %s7, %s118
    %s120 = sld [smem:[#allocation4]]
    %s121 = sld [smem:[#allocation4]]
    %p122 = scmp.lt.s32.totalorder %s121, 3
    %s123 = scalar_select %p122, %s121, 3
    %s124 = scalar_lea.vmem %s7, %s123
    %s125 = sld [smem:[#allocation4]]
    %p126 = scmp.eq.s32.totalorder 0, 0
    // Predicated region
    $region50: #{tpu_custom_call.1} parent=1 // pred_check
      %p127 = pneg %p126
    $region51: #{tpu_custom_call.1} parent=1 // pred_check_branch
      %129 = sbr.rel (%p127) target = $region53
    $region52: #{tpu_custom_call.1} parent=1 // pred_region
      %v130 = vld [vmem:[#allocation5] sm:$0xff]
      %v131 = vld [vmem:[#allocation5 + $0x8] sm:$0xff]
      %v132 = vld [vmem:[#allocation8] sm:$0xff]
      %v133 = vld [vmem:[#allocation8 + $0x8] sm:$0xff]
      %v134 = vld [vmem:[#allocation8 + $0x10] sm:$0xff]
      %v135 = vld [vmem:[#allocation8 + $0x18] sm:$0xff]
      %v136 = vld [vmem:[#allocation8 + $0x20] sm:$0xff]
      %v137 = vld [vmem:[#allocation8 + $0x28] sm:$0xff]
      %v138 = vld [vmem:[#allocation8 + $0x30] sm:$0xff]
      %v139 = vld [vmem:[#allocation8 + $0x38] sm:$0xff]
      %v140 = vld [vmem:[#allocation8 + $0x40] sm:$0xff]
      %v141 = vld [vmem:[#allocation8 + $0x48] sm:$0xff]
      %v142 = vld [vmem:[#allocation8 + $0x50] sm:$0xff]
      %v143 = vld [vmem:[#allocation8 + $0x58] sm:$0xff]
      %v144 = vld [vmem:[%s3] sm:$0x7]
      %v146 = vperm.slane %v144, 0
      %v147 = vperm.slane %v144, 1
      %v148 = vperm.slane %v144, 2
      %vm152 = vcmask 261120
      %v154 = vsel %vm152, %v130, 0
      %v157 = vsel %vm152, %v131, 0
      %159 = vmatpush.msra.mxu0 0.0
      %160 = vmatpush.msra.mxu0 0.0
      %161 = vmatpush.msra.mxu0 0.0
      %162 = vmatpush.msra.mxu0 0.0
      %163 = vmatpush.msra.mxu0 0.0
      %164 = vmatpush.msra.mxu0 0.0
      %165 = vmatpush.msra.mxu0 0.0
      %166 = vmatpush.msra.mxu0 0.0
      %167 = vmatpush.msra.mxu0 0.0
      %168 = vmatpush.msra.mxu0 0.0
      %169 = vmatpush.msra.mxu0 0.0
      %170 = vmatpush.msra.mxu0 0.0
      %171 = vmatpush.msra.mxu0 %v141
      %172 = vmatpush.msra.mxu0 %v138
      %173 = vmatpush.msra.mxu0 %v135
      %174 = vmatpush.msra.mxu0 %v132
      %175 = vmatmul.f32.gmra.mxu0 %v154
      %v176 = vpop.f32.mrf.mxu0
      %v177 = vadd.f32 %v146, %v176
      %178 = vmatmul.f32.gmra.mxu0 %v157
      %v179 = vpop.f32.mrf.mxu0
      %v180 = vadd.f32 %v146, %v179
      %181 = vdwg.mxu0
      %182 = vmatpush.msra.mxu0 0.0
      %183 = vmatpush.msra.mxu0 0.0
      %184 = vmatpush.msra.mxu0 0.0
      %185 = vmatpush.msra.mxu0 0.0
      %186 = vmatpush.msra.mxu0 0.0
      %187 = vmatpush.msra.mxu0 0.0
      %188 = vmatpush.msra.mxu0 0.0
      %189 = vmatpush.msra.mxu0 0.0
      %190 = vmatpush.msra.mxu0 0.0
      %191 = vmatpush.msra.mxu0 0.0
      %192 = vmatpush.msra.mxu0 0.0
      %193 = vmatpush.msra.mxu0 0.0
      %194 = vmatpush.msra.mxu0 %v142
      %195 = vmatpush.msra.mxu0 %v139
      %196 = vmatpush.msra.mxu0 %v136
      %197 = vmatpush.msra.mxu0 %v133
      %198 = vmatmul.f32.gmra.mxu0 %v154
      %v199 = vpop.f32.mrf.mxu0
      %v200 = vadd.f32 %v147, %v199
      %201 = vmatmul.f32.gmra.mxu0 %v157
      %v202 = vpop.f32.mrf.mxu0
      %v203 = vadd.f32 %v147, %v202
      %204 = vdwg.mxu0
      %205 = vmatpush.msra.mxu0 0.0
      %206 = vmatpush.msra.mxu0 0.0
      %207 = vmatpush.msra.mxu0 0.0
      %208 = vmatpush.msra.mxu0 0.0
      %209 = vmatpush.msra.mxu0 0.0
      %210 = vmatpush.msra.mxu0 0.0
      %211 = vmatpush.msra.mxu0 0.0
      %212 = vmatpush.msra.mxu0 0.0
      %213 = vmatpush.msra.mxu0 0.0
      %214 = vmatpush.msra.mxu0 0.0
      %215 = vmatpush.msra.mxu0 0.0
      %216 = vmatpush.msra.mxu0 0.0
      %217 = vmatpush.msra.mxu0 %v143
      %218 = vmatpush.msra.mxu0 %v140
      %219 = vmatpush.msra.mxu0 %v137
      %220 = vmatpush.msra.mxu0 %v134
      %221 = vmatmul.f32.gmra.mxu0 %v154
      %v222 = vpop.f32.mrf.mxu0
      %v223 = vadd.f32 %v148, %v222
      %224 = vmatmul.f32.gmra.mxu0 %v157
      %v225 = vpop.f32.mrf.mxu0
      %v226 = vadd.f32 %v148, %v225
      %227 = vdwg.mxu0
      %v228 = vmax.f32 %v177, 0.0
      %v229 = vmax.f32 %v200, 0.0
      %v230 = vmax.f32 %v223, 0.0
      %v231 = vmax.f32 %v180, 0.0
      %v232 = vmax.f32 %v203, 0.0
      %v233 = vmax.f32 %v226, 0.0
      %v234 = vld [vmem:[#allocation10] sm:$0xff]
      %v235 = vld [vmem:[#allocation10 + $0x8] sm:$0xff]
      %v236 = vld [vmem:[#allocation10 + $0x10] sm:$0xff]
      %v237 = vld [vmem:[#allocation10 + $0x18] sm:$0xff]
      %v238 = vld [vmem:[#allocation10 + $0x20] sm:$0xff]
      %v239 = vld [vmem:[#allocation10 + $0x28] sm:$0xff]
      %v240 = vld [vmem:[#allocation10 + $0x30] sm:$0xff]
      %v241 = vld [vmem:[#allocation10 + $0x38] sm:$0xff]
      %v242 = vld [vmem:[#allocation10 + $0x40] sm:$0xff]
      %v243 = vld [vmem:[#allocation10 + $0x48] sm:$0xff]
      %v244 = vld [vmem:[#allocation10 + $0x50] sm:$0xff]
      %v245 = vld [vmem:[#allocation10 + $0x58] sm:$0xff]
      %v246 = vld [vmem:[#allocation10 + $0x60] sm:$0xff]
      %v247 = vld [vmem:[#allocation10 + $0x68] sm:$0xff]
      %v248 = vld [vmem:[#allocation10 + $0x70] sm:$0xff]
      %v249 = vld [vmem:[#allocation10 + $0x78] sm:$0xff]
      %v250 = vld [vmem:[#allocation11] sm:$0x1]
      %v252 = vperm.slane %v250, 0
      %254 = vmatpush.msra.mxu0 %v249
      %255 = vmatpush.msra.mxu0 %v248
      %256 = vmatpush.msra.mxu0 %v247
      %257 = vmatpush.msra.mxu0 %v246
      %258 = vmatpush.msra.mxu0 %v245
      %259 = vmatpush.msra.mxu0 %v244
      %260 = vmatpush.msra.mxu0 %v243
      %261 = vmatpush.msra.mxu0 %v242
      %262 = vmatpush.msra.mxu0 %v241
      %263 = vmatpush.msra.mxu0 %v240
      %264 = vmatpush.msra.mxu0 %v239
      %265 = vmatpush.msra.mxu0 %v238
      %266 = vmatpush.msra.mxu0 %v237
      %267 = vmatpush.msra.mxu0 %v236
      %268 = vmatpush.msra.mxu0 %v235
      %269 = vmatpush.msra.mxu0 %v234
      %270 = vmatmul.f32.gmra.mxu0 %v228
      %v271 = vpop.f32.mrf.mxu0
      %v272 = vadd.f32 %v252, %v271
      %273 = vmatmul.f32.gmra.mxu0 %v231
      %v274 = vpop.f32.mrf.mxu0
      %v275 = vadd.f32 %v252, %v274
      %276 = vdwg.mxu0
      %v277 = vmax.f32 %v272, 0.0
      %v278 = vmax.f32 %v275, 0.0
      %279 = vst [vmem:[#allocation2] sm:$0xff] %v277
      %280 = vst [vmem:[#allocation2 + $0x18] sm:$0xff] %v278
      %s281 = scalar_lea.vmem [#allocation10], 128
      %v282 = vld [vmem:[%s281] sm:$0xff]
      %v283 = vld [vmem:[%s281 + $0x8] sm:$0xff]
      %v284 = vld [vmem:[%s281 + $0x10] sm:$0xff]
      %v285 = vld [vmem:[%s281 + $0x18] sm:$0xff]
      %v286 = vld [vmem:[%s281 + $0x20] sm:$0xff]
      %v287 = vld [vmem:[%s281 + $0x28] sm:$0xff]
      %v288 = vld [vmem:[%s281 + $0x30] sm:$0xff]
      %v289 = vld [vmem:[%s281 + $0x38] sm:$0xff]
      %v290 = vld [vmem:[%s281 + $0x40] sm:$0xff]
      %v291 = vld [vmem:[%s281 + $0x48] sm:$0xff]
      %v292 = vld [vmem:[%s281 + $0x50] sm:$0xff]
      %v293 = vld [vmem:[%s281 + $0x58] sm:$0xff]
      %v294 = vld [vmem:[%s281 + $0x60] sm:$0xff]
      %v295 = vld [vmem:[%s281 + $0x68] sm:$0xff]
      %v296 = vld [vmem:[%s281 + $0x70] sm:$0xff]
      %v297 = vld [vmem:[%s281 + $0x78] sm:$0xff]
      %s298 = scalar_lea.vmem [#allocation11], 1
      %v299 = vld [vmem:[%s298] sm:$0x1]
      %v301 = vperm.slane %v299, 0
      %303 = vmatpush.msra.mxu0 %v297
      %304 = vmatpush.msra.mxu0 %v296
      %305 = vmatpush.msra.mxu0 %v295
      %306 = vmatpush.msra.mxu0 %v294
      %307 = vmatpush.msra.mxu0 %v293
      %308 = vmatpush.msra.mxu0 %v292
      %309 = vmatpush.msra.mxu0 %v291
      %310 = vmatpush.msra.mxu0 %v290
      %311 = vmatpush.msra.mxu0 %v289
      %312 = vmatpush.msra.mxu0 %v288
      %313 = vmatpush.msra.mxu0 %v287
      %314 = vmatpush.msra.mxu0 %v286
      %315 = vmatpush.msra.mxu0 %v285
      %316 = vmatpush.msra.mxu0 %v284
      %317 = vmatpush.msra.mxu0 %v283
      %318 = vmatpush.msra.mxu0 %v282
      %319 = vmatmul.f32.gmra.mxu0 %v229
      %v320 = vpop.f32.mrf.mxu0
      %v321 = vadd.f32 %v301, %v320
      %322 = vmatmul.f32.gmra.mxu0 %v232
      %v323 = vpop.f32.mrf.mxu0
      %v324 = vadd.f32 %v301, %v323
      %325 = vdwg.mxu0
      %v326 = vmax.f32 %v321, 0.0
      %v327 = vmax.f32 %v324, 0.0
      %328 = vst [vmem:[#allocation2 + $0x8] sm:$0xff] %v326
      %329 = vst [vmem:[#allocation2 + $0x20] sm:$0xff] %v327
      %s330 = scalar_lea.vmem [#allocation10], 256
      %v331 = vld [vmem:[%s330] sm:$0xff]
      %v332 = vld [vmem:[%s330 + $0x8] sm:$0xff]
      %v333 = vld [vmem:[%s330 + $0x10] sm:$0xff]
      %v334 = vld [vmem:[%s330 + $0x18] sm:$0xff]
      %v335 = vld [vmem:[%s330 + $0x20] sm:$0xff]
      %v336 = vld [vmem:[%s330 + $0x28] sm:$0xff]
      %v337 = vld [vmem:[%s330 + $0x30] sm:$0xff]
      %v338 = vld [vmem:[%s330 + $0x38] sm:$0xff]
      %v339 = vld [vmem:[%s330 + $0x40] sm:$0xff]
      %v340 = vld [vmem:[%s330 + $0x48] sm:$0xff]
      %v341 = vld [vmem:[%s330 + $0x50] sm:$0xff]
      %v342 = vld [vmem:[%s330 + $0x58] sm:$0xff]
      %v343 = vld [vmem:[%s330 + $0x60] sm:$0xff]
      %v344 = vld [vmem:[%s330 + $0x68] sm:$0xff]
      %v345 = vld [vmem:[%s330 + $0x70] sm:$0xff]
      %v346 = vld [vmem:[%s330 + $0x78] sm:$0xff]
      %s347 = scalar_lea.vmem [#allocation11], 2
      %v348 = vld [vmem:[%s347] sm:$0x1]
      %v350 = vperm.slane %v348, 0
      %352 = vmatpush.msra.mxu0 %v346
      %353 = vmatpush.msra.mxu0 %v345
      %354 = vmatpush.msra.mxu0 %v344
      %355 = vmatpush.msra.mxu0 %v343
      %356 = vmatpush.msra.mxu0 %v342
      %357 = vmatpush.msra.mxu0 %v341
      %358 = vmatpush.msra.mxu0 %v340
      %359 = vmatpush.msra.mxu0 %v339
      %360 = vmatpush.msra.mxu0 %v338
      %361 = vmatpush.msra.mxu0 %v337
      %362 = vmatpush.msra.mxu0 %v336
      %363 = vmatpush.msra.mxu0 %v335
      %364 = vmatpush.msra.mxu0 %v334
      %365 = vmatpush.msra.mxu0 %v333
      %366 = vmatpush.msra.mxu0 %v332
      %367 = vmatpush.msra.mxu0 %v331
      %368 = vmatmul.f32.gmra.mxu0 %v230
      %v369 = vpop.f32.mrf.mxu0
      %v370 = vadd.f32 %v350, %v369
      %371 = vmatmul.f32.gmra.mxu0 %v233
      %v372 = vpop.f32.mrf.mxu0
      %v373 = vadd.f32 %v350, %v372
      %374 = vdwg.mxu0
      %v375 = vmax.f32 %v370, 0.0
      %v376 = vmax.f32 %v373, 0.0
      %377 = vst [vmem:[#allocation2 + $0x10] sm:$0xff] %v375
      %378 = vst [vmem:[#allocation2 + $0x28] sm:$0xff] %v376
    $region53: #{tpu_custom_call.1} parent=1 // pred_fallthru
      _
    %v379 = vld [vmem:[#allocation2] sm:$0xff]
    %v380 = vld [vmem:[#allocation2 + $0x8] sm:$0xff]
    %v381 = vld [vmem:[#allocation2 + $0x10] sm:$0xff]
    %v382 = vld [vmem:[#allocation2 + $0x18] sm:$0xff]
    %v383 = vld [vmem:[#allocation2 + $0x20] sm:$0xff]
    %v384 = vld [vmem:[#allocation2 + $0x28] sm:$0xff]
    %v385 = vld [vmem:[#allocation13] sm:$0xff]
    %v386 = vld [vmem:[#allocation13 + $0x8] sm:$0xff]
    %v387 = vld [vmem:[#allocation13 + $0x10] sm:$0xff]
    %v388 = vld [vmem:[#allocation13 + $0x18] sm:$0xff]
    %v389 = vld [vmem:[#allocation13 + $0x20] sm:$0xff]
    %v390 = vld [vmem:[#allocation13 + $0x28] sm:$0xff]
    %v391 = vld [vmem:[#allocation13 + $0x30] sm:$0xff]
    %v392 = vld [vmem:[#allocation13 + $0x38] sm:$0xff]
    %v393 = vld [vmem:[#allocation13 + $0x40] sm:$0xff]
    %v394 = vld [vmem:[#allocation13 + $0x48] sm:$0xff]
    %v395 = vld [vmem:[#allocation13 + $0x50] sm:$0xff]
    %v396 = vld [vmem:[#allocation13 + $0x58] sm:$0xff]
    %v397 = vld [vmem:[#allocation13 + $0x60] sm:$0xff]
    %v398 = vld [vmem:[#allocation13 + $0x68] sm:$0xff]
    %v399 = vld [vmem:[#allocation13 + $0x70] sm:$0xff]
    %v400 = vld [vmem:[#allocation13 + $0x78] sm:$0xff]
    %v401 = vld [vmem:[#allocation13 + $0x80] sm:$0xff]
    %v402 = vld [vmem:[#allocation13 + $0x88] sm:$0xff]
    %v403 = vld [vmem:[#allocation13 + $0x90] sm:$0xff]
    %v404 = vld [vmem:[#allocation13 + $0x98] sm:$0xff]
    %v405 = vld [vmem:[#allocation13 + $0xa0] sm:$0xff]
    %v406 = vld [vmem:[#allocation13 + $0xa8] sm:$0xff]
    %v407 = vld [vmem:[#allocation13 + $0xb0] sm:$0xff]
    %v408 = vld [vmem:[#allocation13 + $0xb8] sm:$0xff]
    %v409 = vld [vmem:[#allocation13 + $0xc0] sm:$0xff]
    %v410 = vld [vmem:[#allocation13 + $0xc8] sm:$0xff]
    %v411 = vld [vmem:[#allocation13 + $0xd0] sm:$0xff]
    %v412 = vld [vmem:[#allocation13 + $0xd8] sm:$0xff]
    %v413 = vld [vmem:[#allocation13 + $0xe0] sm:$0xff]
    %v414 = vld [vmem:[#allocation13 + $0xe8] sm:$0xff]
    %v415 = vld [vmem:[#allocation13 + $0xf0] sm:$0xff]
    %v416 = vld [vmem:[#allocation13 + $0xf8] sm:$0xff]
    %v417 = vld [vmem:[#allocation13 + $0x100] sm:$0xff]
    %v418 = vld [vmem:[#allocation13 + $0x108] sm:$0xff]
    %v419 = vld [vmem:[#allocation13 + $0x110] sm:$0xff]
    %v420 = vld [vmem:[#allocation13 + $0x118] sm:$0xff]
    %v421 = vld [vmem:[#allocation13 + $0x120] sm:$0xff]
    %v422 = vld [vmem:[#allocation13 + $0x128] sm:$0xff]
    %v423 = vld [vmem:[#allocation13 + $0x130] sm:$0xff]
    %v424 = vld [vmem:[#allocation13 + $0x138] sm:$0xff]
    %v425 = vld [vmem:[#allocation13 + $0x140] sm:$0xff]
    %v426 = vld [vmem:[#allocation13 + $0x148] sm:$0xff]
    %v427 = vld [vmem:[#allocation13 + $0x150] sm:$0xff]
    %v428 = vld [vmem:[#allocation13 + $0x158] sm:$0xff]
    %v429 = vld [vmem:[#allocation13 + $0x160] sm:$0xff]
    %v430 = vld [vmem:[#allocation13 + $0x168] sm:$0xff]
    %v431 = vld [vmem:[#allocation13 + $0x170] sm:$0xff]
    %v432 = vld [vmem:[#allocation13 + $0x178] sm:$0xff]
    %v433 = vld [vmem:[%s124] sm:$0x1]
    %v435 = vperm.slane %v433, 0
    %437 = vmatpush.msra.mxu0 %v400
    %438 = vmatpush.msra.mxu0 %v399
    %439 = vmatpush.msra.mxu0 %v398
    %440 = vmatpush.msra.mxu0 %v397
    %441 = vmatpush.msra.mxu0 %v396
    %442 = vmatpush.msra.mxu0 %v395
    %443 = vmatpush.msra.mxu0 %v394
    %444 = vmatpush.msra.mxu0 %v393
    %445 = vmatpush.msra.mxu0 %v392
    %446 = vmatpush.msra.mxu0 %v391
    %447 = vmatpush.msra.mxu0 %v390
    %448 = vmatpush.msra.mxu0 %v389
    %449 = vmatpush.msra.mxu0 %v388
    %450 = vmatpush.msra.mxu0 %v387
    %451 = vmatpush.msra.mxu0 %v386
    %452 = vmatpush.msra.mxu0 %v385
    %453 = vmatmul.f32.gmra.mxu0 %v379
    %v454 = vpop.f32.mrf.mxu0
    %v455 = vadd.f32 %v435, %v454
    %456 = vmatmul.f32.gmra.mxu0 %v382
    %v457 = vpop.f32.mrf.mxu0
    %v458 = vadd.f32 %v435, %v457
    %459 = vdwg.mxu0
    %460 = vmatpush.msra.mxu0 %v416
    %461 = vmatpush.msra.mxu0 %v415
    %462 = vmatpush.msra.mxu0 %v414
    %463 = vmatpush.msra.mxu0 %v413
    %464 = vmatpush.msra.mxu0 %v412
    %465 = vmatpush.msra.mxu0 %v411
    %466 = vmatpush.msra.mxu0 %v410
    %467 = vmatpush.msra.mxu0 %v409
    %468 = vmatpush.msra.mxu0 %v408
    %469 = vmatpush.msra.mxu0 %v407
    %470 = vmatpush.msra.mxu0 %v406
    %471 = vmatpush.msra.mxu0 %v405
    %472 = vmatpush.msra.mxu0 %v404
    %473 = vmatpush.msra.mxu0 %v403
    %474 = vmatpush.msra.mxu0 %v402
    %475 = vmatpush.msra.mxu0 %v401
    %476 = vmatmul.f32.gmra.mxu0 %v380
    %v477 = vpop.f32.mrf.mxu0
    %v478 = vadd.f32 %v455, %v477
    %479 = vmatmul.f32.gmra.mxu0 %v383
    %v480 = vpop.f32.mrf.mxu0
    %v481 = vadd.f32 %v458, %v480
    %482 = vdwg.mxu0
    %483 = vmatpush.msra.mxu0 %v432
    %484 = vmatpush.msra.mxu0 %v431
    %485 = vmatpush.msra.mxu0 %v430
    %486 = vmatpush.msra.mxu0 %v429
    %487 = vmatpush.msra.mxu0 %v428
    %488 = vmatpush.msra.mxu0 %v427
    %489 = vmatpush.msra.mxu0 %v426
    %490 = vmatpush.msra.mxu0 %v425
    %491 = vmatpush.msra.mxu0 %v424
    %492 = vmatpush.msra.mxu0 %v423
    %493 = vmatpush.msra.mxu0 %v422
    %494 = vmatpush.msra.mxu0 %v421
    %495 = vmatpush.msra.mxu0 %v420
    %496 = vmatpush.msra.mxu0 %v419
    %497 = vmatpush.msra.mxu0 %v418
    %498 = vmatpush.msra.mxu0 %v417
    %499 = vmatmul.f32.gmra.mxu0 %v381
    %v500 = vpop.f32.mrf.mxu0
    %v501 = vadd.f32 %v478, %v500
    %502 = vmatmul.f32.gmra.mxu0 %v384
    %v503 = vpop.f32.mrf.mxu0
    %v504 = vadd.f32 %v481, %v503
    %505 = vdwg.mxu0
    %506 = vst [vmem:[#allocation14] sm:$0xff] %v501
    %507 = vst [vmem:[#allocation14 + $0x8] sm:$0xff] %v504
    // Predicated region
    $region54: #{tpu_custom_call.1} parent=1 // pred_check
      _
    $region55: #{tpu_custom_call.1} parent=1 // pred_check_branch
      %509 = sbr.rel (0) target = $region57
    $region56: #{tpu_custom_call.1} parent=1 // pred_region
      %511 = vsyncadd [#allocation7], 0
      %s512 = sshll.u32 [#allocation14], 4
      %s513 = int_to_ptr.vmem [resolvable:$true] %s512
      %s514 = sshll.u32 %s8, 4
      %s515 = int_to_ptr.hbm [resolvable:$true] %s514
      %520 = dma.vmem_to_hbm [thread:$0]  %s513, 256, %s515, [#allocation7], 128, 128, 8
    $region57: #{tpu_custom_call.1} parent=1 // pred_fallthru
      _
    // Predicated region
    $region58: #{tpu_custom_call.1} parent=1 // pred_check
      _
    $region59: #{tpu_custom_call.1} parent=1 // pred_check_branch
      %522 = sbr.rel (0) target = $region61
    $region60: #{tpu_custom_call.1} parent=1 // pred_region
      %524 = dma.done [#allocation7], 256
    $region61: #{tpu_custom_call.1} parent=1 // pred_fallthru
      _
    %525 = vsyncpa [#allocation6], 1
    %526 = vsyncpa [#allocation9], 1
    %527 = vsyncpa [#allocation12], 1
    %528 = vsyncpa [#allocation7], 1

</llo_original>
